<compile_context>
chip_gen: v6e
topology: v6e:2x2x1
jax: 0.10.0
libtpu: 0.0.40
codegen_flags: <defaults>
</compile_context>

<pallas_src>
import jax
import jax.numpy as jnp
from jax.experimental import pallas as pl
from jax.experimental.pallas import tpu as pltpu

BN_EPS = 1e-5
OUT_W = 2          # true output width of the final Linear(32, 2)
H1, H2 = 64, 32    # hidden widths


def _round_up(n, m):
    return ((n + m - 1) // m) * m


def ffnet_kernel(x_ref, w1_ref, b1_ref, w2_ref, b2_ref, w3_ref, b3_ref, o_ref):
    x = x_ref[...]
    # Linear(input_dim, 64) with BN folded in, + ReLU (Dropout = identity).
    h1 = jnp.dot(x, w1_ref[...], preferred_element_type=jnp.float32) + b1_ref[...]
    h1 = jnp.maximum(h1, 0.0)
    # Linear(64, 32) with BN folded in, + ReLU (Dropout = identity).
    h2 = jnp.dot(h1, w2_ref[...], preferred_element_type=jnp.float32) + b2_ref[...]
    h2 = jnp.maximum(h2, 0.0)
    # Linear(32, 2) — narrow (unpadded) output block.
    o_ref[...] = (jnp.dot(h2, w3_ref[...], preferred_element_type=jnp.float32)
                  + b3_ref[...]).astype(o_ref.dtype)


def _choose_tile(N, D):
    """Batch tile rows: VMEM-budget-derived, multiple of 8, >= ~4 grid steps."""
    # Per-row VMEM estimate: double-buffered x/out blocks + h1/h2 temps + slack.
    per_row_bytes = 4 * (2 * (D + OUT_W) + H1 + H2 + 64)
    budget_bytes = 24 * 1024 * 1024          # conservative across v5e/v6e/v7x
    tn = budget_bytes // per_row_bytes
    tn = min(tn, 16384)                      # diminishing returns past this
    # At least ~4 grid steps so megacore "parallel" sharding (v7x) engages.
    tn = min(tn, _round_up(pl.cdiv(N, 4), 8))
    tn = max(8, (tn // 8) * 8)
    return tn


def ffnet_forward(x, params, *, tile_n=None):
    """x: (N, input_dim) f32 (bf16 also accepted; accumulation stays f32)."""
    N, D = x.shape
    f32 = jnp.float32

    # --- fold eval-mode BatchNorm into the Linear weights / biases (trace time) ---
    s1 = params["g1"] * jax.lax.rsqrt(params["v1"] + BN_EPS)           # (1, 64)
    w1 = (params["w1"] * s1).astype(f32)                                # (D, 64)
    b1 = ((params["b1"] - params["m1"]) * s1 + params["be1"]).astype(f32)

    s2 = params["g2"] * jax.lax.rsqrt(params["v2"] + BN_EPS)           # (1, 32)
    w2 = (params["w2"] * s2).astype(f32)                                # (64, 32)
    b2 = ((params["b2"] - params["m2"]) * s2 + params["be2"]).astype(f32)

    w3 = params["w3"].astype(f32)                                       # (32, 2)
    b3 = params["b3"].astype(f32)                                       # (1, 2)

    # --- batch tiling: ragged N handled by Pallas (no jnp.pad of x) ---
    tn = _choose_tile(N, D) if tile_n is None else max(8, (tile_n // 8) * 8)
    grid = (pl.cdiv(N, tn),)

    out = pl.pallas_call(
        ffnet_kernel,
        out_shape=jax.ShapeDtypeStruct((N, OUT_W), jnp.float32),
        grid=grid,
        in_specs=[
            # x: tiled along the batch axis; last (partial) block is padded by
            # Pallas, padded rows only produce output rows that are clipped.
            pl.BlockSpec((tn, D), lambda i: (i, 0)),
            # weights / biases: whole-array blocks with constant index_maps ->
            # copied to VMEM once and reused across every batch tile.
            pl.BlockSpec(w1.shape, lambda i: (0, 0)),
            pl.BlockSpec(b1.shape, lambda i: (0, 0)),
            pl.BlockSpec(w2.shape, lambda i: (0, 0)),
            pl.BlockSpec(b2.shape, lambda i: (0, 0)),
            pl.BlockSpec(w3.shape, lambda i: (0, 0)),
            pl.BlockSpec(b3.shape, lambda i: (0, 0)),
        ],
        out_specs=pl.BlockSpec((tn, OUT_W), lambda i: (i, 0)),
        compiler_params=pltpu.CompilerParams(
            dimension_semantics=("parallel",),        # megacore sharding on v7x
            vmem_limit_bytes=48 * 1024 * 1024,        # safe on v5e/v6e/v7x
        ),
    )(x, w1, b1, w2, b2, w3, b3)

    return out


def init_params(input_dim, key):
    """Deterministic synthetic parameters matching FFNet(input_dim) shapes."""
    ks = jax.random.split(key, 3)
    f32 = jnp.float32

    def lin(k, fan_in, fan_out):
        kw, kb = jax.random.split(k)
        bound = 1.0 / (fan_in ** 0.5)
        w = jax.random.uniform(kw, (fan_in, fan_out), f32, -bound, bound)
        b = jax.random.uniform(kb, (1, fan_out), f32, -bound, bound)
        return w, b

    w1, b1 = lin(ks[0], input_dim, H1)
    w2, b2 = lin(ks[1], H1, H2)
    w3, b3 = lin(ks[2], H2, OUT_W)

    return dict(
        w1=w1, b1=b1,
        g1=jnp.ones((1, H1), f32), be1=jnp.zeros((1, H1), f32),
        m1=jnp.zeros((1, H1), f32), v1=jnp.ones((1, H1), f32),
        w2=w2, b2=b2,
        g2=jnp.ones((1, H2), f32), be2=jnp.zeros((1, H2), f32),
        m2=jnp.zeros((1, H2), f32), v2=jnp.ones((1, H2), f32),
        w3=w3, b3=b3,
    )


def ffnet_reference(x, p):
    """Pure-JAX reference (eval-mode BN, identity dropout)."""
    h = x @ p["w1"] + p["b1"]
    h = (h - p["m1"]) * jax.lax.rsqrt(p["v1"] + BN_EPS) * p["g1"] + p["be1"]
    h = jnp.maximum(h, 0.0)
    h = h @ p["w2"] + p["b2"]
    h = (h - p["m2"]) * jax.lax.rsqrt(p["v2"] + BN_EPS) * p["g2"] + p["be2"]
    h = jnp.maximum(h, 0.0)
    return h @ p["w3"] + p["b3"]


if __name__ == "__main__":
    key = jax.random.PRNGKey(0)
    k_x, k_x2, k_p = jax.random.split(key, 3)

    INPUT_DIM = 16
    params = init_params(INPUT_DIM, k_p)

    # Small smoke test (single tile, grid=(1,)).
    N = 8
    x = jax.random.normal(k_x, (N, INPUT_DIM), jnp.float32)
    out = jax.block_until_ready(ffnet_forward(x, params))
    ref = ffnet_reference(x, params)
    assert out.shape == (N, 2), out.shape
    assert jnp.allclose(out, ref, atol=1e-4, rtol=1e-4), "mismatch vs reference (N=8)"

    # Multi-tile test with a ragged batch (exercises the non-divisible grid:
    # tile is capped to give >= 4 pipelined steps, last block is partial).
    N2 = 300
    x2 = jax.random.normal(k_x2, (N2, INPUT_DIM), jnp.float32)
    out2 = jax.block_until_ready(ffnet_forward(x2, params))
    ref2 = ffnet_reference(x2, params)
    assert out2.shape == (N2, 2), out2.shape
    assert jnp.allclose(out2, ref2, atol=1e-4, rtol=1e-4), "mismatch vs reference (N=300)"

    print("KERNEL_OK")
</pallas_src>

<mosaic_0001>
module attributes {stable_mosaic.version = 11 : i64} {
  func.func @ffnet_kernel(%arg0: i32, %arg1: memref<8x16xf32, #tpu.memory_space<vmem>>, %arg2: memref<16x64xf32, #tpu.memory_space<vmem>>, %arg3: memref<1x64xf32, #tpu.memory_space<vmem>>, %arg4: memref<64x32xf32, #tpu.memory_space<vmem>>, %arg5: memref<1x32xf32, #tpu.memory_space<vmem>>, %arg6: memref<32x2xf32, #tpu.memory_space<vmem>>, %arg7: memref<1x2xf32, #tpu.memory_space<vmem>>, %arg8: memref<8x2xf32, #tpu.memory_space<vmem>>) attributes {dimension_semantics = [#tpu.dimension_semantics<parallel>], iteration_bounds = array<i64: 1>, scalar_prefetch = 0 : i64, scratch_operands = 0 : i64, tpu.core_type = #tpu.core_type<tc>, window_params = [{transform_indices = @transform_0, window_bounds = array<i64: 8, 16>}, {pipeline_mode = #tpu.pipeline_mode<synchronous>, transform_indices = @transform_1, window_bounds = array<i64: 16, 64>}, {pipeline_mode = #tpu.pipeline_mode<synchronous>, transform_indices = @transform_2, window_bounds = array<i64: 1, 64>}, {pipeline_mode = #tpu.pipeline_mode<synchronous>, transform_indices = @transform_3, window_bounds = array<i64: 64, 32>}, {pipeline_mode = #tpu.pipeline_mode<synchronous>, transform_indices = @transform_4, window_bounds = array<i64: 1, 32>}, {pipeline_mode = #tpu.pipeline_mode<synchronous>, transform_indices = @transform_5, window_bounds = array<i64: 32, 2>}, {pipeline_mode = #tpu.pipeline_mode<synchronous>, transform_indices = @transform_6, window_bounds = array<i64: 1, 2>}, {transform_indices = @transform_7, window_bounds = array<i64: 8, 2>}]} {
    %c0 = arith.constant 0 : index
    %c0_0 = arith.constant 0 : index
    %0 = vector.load %arg1[%c0, %c0_0] : memref<8x16xf32, #tpu.memory_space<vmem>>, vector<8x16xf32>
    %c0_1 = arith.constant 0 : index
    %c0_2 = arith.constant 0 : index
    %1 = vector.load %arg2[%c0_1, %c0_2] : memref<16x64xf32, #tpu.memory_space<vmem>>, vector<16x64xf32>
    %cst = arith.constant dense<0.000000e+00> : vector<8x64xf32>
    %2 = tpu.matmul %0, %1, %cst {dimension_numbers = #tpu.dot_dimension_numbers<[1], [0], [0], [1], [0, 0, 1, 1], [], []>} : vector<8x16xf32>, vector<16x64xf32>, vector<8x64xf32> -> vector<8x64xf32>
    %c0_3 = arith.constant 0 : index
    %c0_4 = arith.constant 0 : index
    %3 = vector.load %arg3[%c0_3, %c0_4] : memref<1x64xf32, #tpu.memory_space<vmem>>, vector<1x64xf32>
    %4 = vector.broadcast %3 : vector<1x64xf32> to vector<8x64xf32>
    %5 = arith.addf %2, %4 : vector<8x64xf32>
    %cst_5 = arith.constant 0.000000e+00 : f32
    %6 = vector.broadcast %cst_5 : f32 to vector<8x64xf32>
    %7 = arith.maximumf %5, %6 : vector<8x64xf32>
    %c0_6 = arith.constant 0 : index
    %c0_7 = arith.constant 0 : index
    %8 = vector.load %arg4[%c0_6, %c0_7] : memref<64x32xf32, #tpu.memory_space<vmem>>, vector<64x32xf32>
    %cst_8 = arith.constant dense<0.000000e+00> : vector<8x32xf32>
    %9 = tpu.matmul %7, %8, %cst_8 {dimension_numbers = #tpu.dot_dimension_numbers<[1], [0], [0], [1], [0, 0, 1, 1], [], []>} : vector<8x64xf32>, vector<64x32xf32>, vector<8x32xf32> -> vector<8x32xf32>
    %c0_9 = arith.constant 0 : index
    %c0_10 = arith.constant 0 : index
    %10 = vector.load %arg5[%c0_9, %c0_10] : memref<1x32xf32, #tpu.memory_space<vmem>>, vector<1x32xf32>
    %11 = vector.broadcast %10 : vector<1x32xf32> to vector<8x32xf32>
    %12 = arith.addf %9, %11 : vector<8x32xf32>
    %cst_11 = arith.constant 0.000000e+00 : f32
    %13 = vector.broadcast %cst_11 : f32 to vector<8x32xf32>
    %14 = arith.maximumf %12, %13 : vector<8x32xf32>
    %c0_12 = arith.constant 0 : index
    %c0_13 = arith.constant 0 : index
    %15 = vector.load %arg6[%c0_12, %c0_13] : memref<32x2xf32, #tpu.memory_space<vmem>>, vector<32x2xf32>
    %cst_14 = arith.constant dense<0.000000e+00> : vector<8x2xf32>
    %16 = tpu.matmul %14, %15, %cst_14 {dimension_numbers = #tpu.dot_dimension_numbers<[1], [0], [0], [1], [0, 0, 1, 1], [], []>} : vector<8x32xf32>, vector<32x2xf32>, vector<8x2xf32> -> vector<8x2xf32>
    %c0_15 = arith.constant 0 : index
    %c0_16 = arith.constant 0 : index
    %17 = vector.load %arg7[%c0_15, %c0_16] : memref<1x2xf32, #tpu.memory_space<vmem>>, vector<1x2xf32>
    %18 = vector.broadcast %17 : vector<1x2xf32> to vector<8x2xf32>
    %19 = arith.addf %16, %18 : vector<8x2xf32>
    %c0_17 = arith.constant 0 : index
    %c0_18 = arith.constant 0 : index
    %20 = vector.load %arg8[%c0_17, %c0_18] : memref<8x2xf32, #tpu.memory_space<vmem>>, vector<8x2xf32>
    tpu.vector_store %arg8[%c0_17, %c0_18], %19 {strides = array<i32>} : memref<8x2xf32, #tpu.memory_space<vmem>>, vector<8x2xf32>,
    return
  }
  func.func @transform_0(%arg0: i32) -> (i32, i32) {
    %c0_i32 = arith.constant 0 : i32
    %c0_i32_0 = arith.constant 0 : i32
    return %arg0, %c0_i32 : i32, i32
  }
  func.func @transform_1(%arg0: i32) -> (i32, i32) {
    %c0_i32 = arith.constant 0 : i32
    %c0_i32_0 = arith.constant 0 : i32
    %c0_i32_1 = arith.constant 0 : i32
    return %c0_i32, %c0_i32_0 : i32, i32
  }
  func.func @transform_2(%arg0: i32) -> (i32, i32) {
    %c0_i32 = arith.constant 0 : i32
    %c0_i32_0 = arith.constant 0 : i32
    %c0_i32_1 = arith.constant 0 : i32
    return %c0_i32, %c0_i32_0 : i32, i32
  }
  func.func @transform_3(%arg0: i32) -> (i32, i32) {
    %c0_i32 = arith.constant 0 : i32
    %c0_i32_0 = arith.constant 0 : i32
    %c0_i32_1 = arith.constant 0 : i32
    return %c0_i32, %c0_i32_0 : i32, i32
  }
  func.func @transform_4(%arg0: i32) -> (i32, i32) {
    %c0_i32 = arith.constant 0 : i32
    %c0_i32_0 = arith.constant 0 : i32
    %c0_i32_1 = arith.constant 0 : i32
    return %c0_i32, %c0_i32_0 : i32, i32
  }
  func.func @transform_5(%arg0: i32) -> (i32, i32) {
    %c0_i32 = arith.constant 0 : i32
    %c0_i32_0 = arith.constant 0 : i32
    %c0_i32_1 = arith.constant 0 : i32
    return %c0_i32, %c0_i32_0 : i32, i32
  }
  func.func @transform_6(%arg0: i32) -> (i32, i32) {
    %c0_i32 = arith.constant 0 : i32
    %c0_i32_0 = arith.constant 0 : i32
    %c0_i32_1 = arith.constant 0 : i32
    return %c0_i32, %c0_i32_0 : i32, i32
  }
  func.func @transform_7(%arg0: i32) -> (i32, i32) {
    %c0_i32 = arith.constant 0 : i32
    %c0_i32_0 = arith.constant 0 : i32
    return %arg0, %c0_i32 : i32, i32
  }
}

</mosaic_0001>

<llo_original>
// kernel: tpu_custom_call.1
$region0: #{tpu_custom_call.1}
  #allocation0 [shape = 'u32[]', space=smem, size = 0x4, offset = 0x4, fixed_abs, tag = 'smem constant byte address 0x4 - core index']
  #allocation1 [shape = 'u32[144,128]{1,0:T(1,128)}', space=vmem, size = 0x12000, scoped, tag = 'internal scratch']
  %s0 = inlined_call_operand.vmem [shape: f32[8,16], index: 0, kind: input, shape index: {}]
  %s1 = inlined_call_operand.vmem [shape: f32[16,64], index: 1, kind: input, shape index: {}]
  %s2 = inlined_call_operand.vmem [shape: f32[1,64], index: 2, kind: input, shape index: {}]
  %s3 = inlined_call_operand.vmem [shape: f32[64,32], index: 3, kind: input, shape index: {}]
  %s4 = inlined_call_operand.vmem [shape: f32[1,32], index: 4, kind: input, shape index: {}]
  %s5 = inlined_call_operand.vmem [shape: f32[32,2], index: 5, kind: input, shape index: {}]
  %s6 = inlined_call_operand.vmem [shape: f32[1,2], index: 6, kind: input, shape index: {}]
  %s7 = inlined_call_operand.vmem [shape: f32[8,2], index: 7, kind: output, shape index: {}]
  %s8 = sld [smem:[#allocation0]]
  $region38: #{tpu_custom_call.1} parent=0
    _
  %s10 = ssub.s32 1, %s8
  %s11 = scalar_select 0, %s10, %s8
  // Predicated region
  $region2: #{tpu_custom_call.1} parent=0 // pred_check
    _
  $region3: #{tpu_custom_call.1} parent=0 // pred_check_branch
    %13 = sbr.rel (0) target = $region5
  $region4: #{tpu_custom_call.1} parent=0 // pred_region
    _
  $region5: #{tpu_custom_call.1} parent=0 // pred_fallthru
    _
  // Predicated region
  $region6: #{tpu_custom_call.1} parent=0 // pred_check
    _
  $region7: #{tpu_custom_call.1} parent=0 // pred_check_branch
    %15 = sbr.rel (0) target = $region9
  $region8: #{tpu_custom_call.1} parent=0 // pred_region
    _
  $region9: #{tpu_custom_call.1} parent=0 // pred_fallthru
    _
  // Predicated region
  $region10: #{tpu_custom_call.1} parent=0 // pred_check
    _
  $region11: #{tpu_custom_call.1} parent=0 // pred_check_branch
    %17 = sbr.rel (0) target = $region13
  $region12: #{tpu_custom_call.1} parent=0 // pred_region
    _
  $region13: #{tpu_custom_call.1} parent=0 // pred_fallthru
    _
  // Predicated region
  $region14: #{tpu_custom_call.1} parent=0 // pred_check
    _
  $region15: #{tpu_custom_call.1} parent=0 // pred_check_branch
    %19 = sbr.rel (0) target = $region17
  $region16: #{tpu_custom_call.1} parent=0 // pred_region
    _
  $region17: #{tpu_custom_call.1} parent=0 // pred_fallthru
    _
  // Predicated region
  $region18: #{tpu_custom_call.1} parent=0 // pred_check
    _
  $region19: #{tpu_custom_call.1} parent=0 // pred_check_branch
    %21 = sbr.rel (0) target = $region21
  $region20: #{tpu_custom_call.1} parent=0 // pred_region
    _
  $region21: #{tpu_custom_call.1} parent=0 // pred_fallthru
    _
  // Predicated region
  $region22: #{tpu_custom_call.1} parent=0 // pred_check
    _
  $region23: #{tpu_custom_call.1} parent=0 // pred_check_branch
    %23 = sbr.rel (0) target = $region25
  $region24: #{tpu_custom_call.1} parent=0 // pred_region
    _
  $region25: #{tpu_custom_call.1} parent=0 // pred_fallthru
    _
  // Predicated region
  $region26: #{tpu_custom_call.1} parent=0 // pred_check
    _
  $region27: #{tpu_custom_call.1} parent=0 // pred_check_branch
    %25 = sbr.rel (0) target = $region29
  $region28: #{tpu_custom_call.1} parent=0 // pred_region
    _
  $region29: #{tpu_custom_call.1} parent=0 // pred_fallthru
    _
  %v26 = vld [vmem:[%s0] sm:$0xff]
  %v27 = vld [vmem:[%s1] sm:$0xff]
  %v28 = vld [vmem:[%s1 + $0x8] sm:$0xff]
  %v29 = vld [vmem:[%s2] sm:$0x1]
  %v31 = vlaneseq
  %v32 = vshrl.u32 %v31, 7
  %v33 = vsub.s32 0, %v32
  %v34 = vrot.slane %v29, %v33
  %vm36 = vcmask 130048
  %v38 = vsel %vm36, %v26, 0
  %40 = vmatprep.subr.mxu0 0.0
  %41 = vmatpush1.msra.mxu0 0.0
  %42 = vmatprep.subr.mxu0 0.0
  %43 = vmatpush1.msra.mxu0 0.0
  %44 = vmatprep.subr.mxu0 0.0
  %45 = vmatpush1.msra.mxu0 0.0
  %46 = vmatprep.subr.mxu0 0.0
  %47 = vmatpush1.msra.mxu0 0.0
  %48 = vmatprep.subr.mxu0 0.0
  %49 = vmatpush1.msra.mxu0 0.0
  %50 = vmatprep.subr.mxu0 0.0
  %51 = vmatpush1.msra.mxu0 0.0
  %52 = vmatprep.subr.mxu0 0.0
  %53 = vmatpush1.msra.mxu0 0.0
  %54 = vmatprep.subr.mxu0 0.0
  %55 = vmatpush1.msra.mxu0 0.0
  %56 = vmatprep.subr.mxu0 0.0
  %57 = vmatpush1.msra.mxu0 0.0
  %58 = vmatprep.subr.mxu0 0.0
  %59 = vmatpush1.msra.mxu0 0.0
  %60 = vmatprep.subr.mxu0 0.0
  %61 = vmatpush1.msra.mxu0 0.0
  %62 = vmatprep.subr.mxu0 0.0
  %63 = vmatpush1.msra.mxu0 0.0
  %64 = vmatprep.subr.mxu0 0.0
  %65 = vmatpush1.msra.mxu0 0.0
  %66 = vmatprep.subr.mxu0 0.0
  %67 = vmatpush1.msra.mxu0 0.0
  %68 = vmatprep.subr.mxu0 0.0
  %69 = vmatpush1.msra.mxu0 %v28
  %70 = vmatprep.subr.mxu0 0.0
  %71 = vmatpush1.msra.mxu0 %v27
  %72 = vmatprep.subr.mxu0 0.0
  %73 = vmatpush2.msra.mxu0 0.0
  %74 = vmatprep.subr.mxu0 0.0
  %75 = vmatpush2.msra.mxu0 0.0
  %76 = vmatprep.subr.mxu0 0.0
  %77 = vmatpush2.msra.mxu0 0.0
  %78 = vmatprep.subr.mxu0 0.0
  %79 = vmatpush2.msra.mxu0 0.0
  %80 = vmatprep.subr.mxu0 0.0
  %81 = vmatpush2.msra.mxu0 0.0
  %82 = vmatprep.subr.mxu0 0.0
  %83 = vmatpush2.msra.mxu0 0.0
  %84 = vmatprep.subr.mxu0 0.0
  %85 = vmatpush2.msra.mxu0 0.0
  %86 = vmatprep.subr.mxu0 0.0
  %87 = vmatpush2.msra.mxu0 0.0
  %88 = vmatprep.subr.mxu0 0.0
  %89 = vmatpush2.msra.mxu0 0.0
  %90 = vmatprep.subr.mxu0 0.0
  %91 = vmatpush2.msra.mxu0 0.0
  %92 = vmatprep.subr.mxu0 0.0
  %93 = vmatpush2.msra.mxu0 0.0
  %94 = vmatprep.subr.mxu0 0.0
  %95 = vmatpush2.msra.mxu0 0.0
  %96 = vmatprep.subr.mxu0 0.0
  %97 = vmatpush2.msra.mxu0 0.0
  %98 = vmatprep.subr.mxu0 0.0
  %99 = vmatpush2.msra.mxu0 0.0
  %100 = vmatprep.subr.mxu0 0.0
  %101 = vmatpush2.msra.mxu0 0.0
  %102 = vmatprep.subr.mxu0 0.0
  %103 = vmatpush2.msra.mxu0 0.0
  %104 = vmatprep.mubr.f32.mxu0 0.0
  %105 = vmatmul.mubr.f32.gmra.mxu0 %v38
  %v106 = vpop.f32.mrf.mxu0
  %v107 = vadd.f32 %v34, %v106
  %v108 = vpop.f32.mrf.mxu0
  %109 = vdwg.mxu0
  %v110 = vmax.f32 %v107, 0.0
  %v111 = vld [vmem:[%s3] sm:$0xff]
  %v112 = vld [vmem:[%s3 + $0x8] sm:$0xff]
  %v113 = vld [vmem:[%s3 + $0x10] sm:$0xff]
  %v114 = vld [vmem:[%s3 + $0x18] sm:$0xff]
  %v115 = vld [vmem:[%s3 + $0x20] sm:$0xff]
  %v116 = vld [vmem:[%s3 + $0x28] sm:$0xff]
  %v117 = vld [vmem:[%s3 + $0x30] sm:$0xff]
  %v118 = vld [vmem:[%s3 + $0x38] sm:$0xff]
  %v119 = vld [vmem:[%s4] sm:$0x1]
  %v121 = vlaneseq
  %v122 = vshrl.u32 %v121, 7
  %v123 = vsub.s32 0, %v122
  %v124 = vrot.slane %v119, %v123
  %vm126 = vcmask 523264
  %v128 = vsel %vm126, %v110, 0
  %130 = vmatprep.subr.mxu0 0.0
  %131 = vmatpush1.msra.mxu0 0.0
  %132 = vmatprep.subr.mxu0 0.0
  %133 = vmatpush1.msra.mxu0 0.0
  %134 = vmatprep.subr.mxu0 0.0
  %135 = vmatpush1.msra.mxu0 0.0
  %136 = vmatprep.subr.mxu0 0.0
  %137 = vmatpush1.msra.mxu0 0.0
  %138 = vmatprep.subr.mxu0 0.0
  %139 = vmatpush1.msra.mxu0 0.0
  %140 = vmatprep.subr.mxu0 0.0
  %141 = vmatpush1.msra.mxu0 0.0
  %142 = vmatprep.subr.mxu0 0.0
  %143 = vmatpush1.msra.mxu0 0.0
  %144 = vmatprep.subr.mxu0 0.0
  %145 = vmatpush1.msra.mxu0 0.0
  %146 = vmatprep.subr.mxu0 0.0
  %147 = vmatpush1.msra.mxu0 %v118
  %148 = vmatprep.subr.mxu0 0.0
  %149 = vmatpush1.msra.mxu0 %v117
  %150 = vmatprep.subr.mxu0 0.0
  %151 = vmatpush1.msra.mxu0 %v116
  %152 = vmatprep.subr.mxu0 0.0
  %153 = vmatpush1.msra.mxu0 %v115
  %154 = vmatprep.subr.mxu0 0.0
  %155 = vmatpush1.msra.mxu0 %v114
  %156 = vmatprep.subr.mxu0 0.0
  %157 = vmatpush1.msra.mxu0 %v113
  %158 = vmatprep.subr.mxu0 0.0
  %159 = vmatpush1.msra.mxu0 %v112
  %160 = vmatprep.subr.mxu0 0.0
  %161 = vmatpush1.msra.mxu0 %v111
  %162 = vmatprep.subr.mxu0 0.0
  %163 = vmatpush2.msra.mxu0 0.0
  %164 = vmatprep.subr.mxu0 0.0
  %165 = vmatpush2.msra.mxu0 0.0
  %166 = vmatprep.subr.mxu0 0.0
  %167 = vmatpush2.msra.mxu0 0.0
  %168 = vmatprep.subr.mxu0 0.0
  %169 = vmatpush2.msra.mxu0 0.0
  %170 = vmatprep.subr.mxu0 0.0
  %171 = vmatpush2.msra.mxu0 0.0
  %172 = vmatprep.subr.mxu0 0.0
  %173 = vmatpush2.msra.mxu0 0.0
  %174 = vmatprep.subr.mxu0 0.0
  %175 = vmatpush2.msra.mxu0 0.0
  %176 = vmatprep.subr.mxu0 0.0
  %177 = vmatpush2.msra.mxu0 0.0
  %178 = vmatprep.subr.mxu0 0.0
  %179 = vmatpush2.msra.mxu0 0.0
  %180 = vmatprep.subr.mxu0 0.0
  %181 = vmatpush2.msra.mxu0 0.0
  %182 = vmatprep.subr.mxu0 0.0
  %183 = vmatpush2.msra.mxu0 0.0
  %184 = vmatprep.subr.mxu0 0.0
  %185 = vmatpush2.msra.mxu0 0.0
  %186 = vmatprep.subr.mxu0 0.0
  %187 = vmatpush2.msra.mxu0 0.0
  %188 = vmatprep.subr.mxu0 0.0
  %189 = vmatpush2.msra.mxu0 0.0
  %190 = vmatprep.subr.mxu0 0.0
  %191 = vmatpush2.msra.mxu0 0.0
  %192 = vmatprep.subr.mxu0 0.0
  %193 = vmatpush2.msra.mxu0 0.0
  %194 = vmatprep.mubr.f32.mxu0 0.0
  %195 = vmatmul.mubr.f32.gmra.mxu0 %v128
  %v196 = vpop.f32.mrf.mxu0
  %v197 = vadd.f32 %v124, %v196
  %v198 = vpop.f32.mrf.mxu0
  %199 = vdwg.mxu0
  %v200 = vmax.f32 %v197, 0.0
  %v201 = vld [vmem:[%s5] sm:$0xff]
  %v202 = vld [vmem:[%s5 + $0x8] sm:$0xff]
  %v203 = vld [vmem:[%s5 + $0x10] sm:$0xff]
  %v204 = vld [vmem:[%s5 + $0x18] sm:$0xff]
  %v205 = vld [vmem:[%s6] sm:$0x1]
  %v207 = vlaneseq
  %v208 = vshrl.u32 %v207, 7
  %v209 = vsub.s32 0, %v208
  %v210 = vrot.slane %v205, %v209
  %vm212 = vcmask 261120
  %v214 = vsel %vm212, %v200, 0
  %216 = vmatprep.subr.mxu0 0.0
  %217 = vmatpush1.msra.mxu0 0.0
  %218 = vmatprep.subr.mxu0 0.0
  %219 = vmatpush1.msra.mxu0 0.0
  %220 = vmatprep.subr.mxu0 0.0
  %221 = vmatpush1.msra.mxu0 0.0
  %222 = vmatprep.subr.mxu0 0.0
  %223 = vmatpush1.msra.mxu0 0.0
  %224 = vmatprep.subr.mxu0 0.0
  %225 = vmatpush1.msra.mxu0 0.0
  %226 = vmatprep.subr.mxu0 0.0
  %227 = vmatpush1.msra.mxu0 0.0
  %228 = vmatprep.subr.mxu0 0.0
  %229 = vmatpush1.msra.mxu0 0.0
  %230 = vmatprep.subr.mxu0 0.0
  %231 = vmatpush1.msra.mxu0 0.0
  %232 = vmatprep.subr.mxu0 0.0
  %233 = vmatpush1.msra.mxu0 0.0
  %234 = vmatprep.subr.mxu0 0.0
  %235 = vmatpush1.msra.mxu0 0.0
  %236 = vmatprep.subr.mxu0 0.0
  %237 = vmatpush1.msra.mxu0 0.0
  %238 = vmatprep.subr.mxu0 0.0
  %239 = vmatpush1.msra.mxu0 0.0
  %240 = vmatprep.subr.mxu0 0.0
  %241 = vmatpush1.msra.mxu0 %v204
  %242 = vmatprep.subr.mxu0 0.0
  %243 = vmatpush1.msra.mxu0 %v203
  %244 = vmatprep.subr.mxu0 0.0
  %245 = vmatpush1.msra.mxu0 %v202
  %246 = vmatprep.subr.mxu0 0.0
  %247 = vmatpush1.msra.mxu0 %v201
  %248 = vmatprep.subr.mxu0 0.0
  %249 = vmatpush2.msra.mxu0 0.0
  %250 = vmatprep.subr.mxu0 0.0
  %251 = vmatpush2.msra.mxu0 0.0
  %252 = vmatprep.subr.mxu0 0.0
  %253 = vmatpush2.msra.mxu0 0.0
  %254 = vmatprep.subr.mxu0 0.0
  %255 = vmatpush2.msra.mxu0 0.0
  %256 = vmatprep.subr.mxu0 0.0
  %257 = vmatpush2.msra.mxu0 0.0
  %258 = vmatprep.subr.mxu0 0.0
  %259 = vmatpush2.msra.mxu0 0.0
  %260 = vmatprep.subr.mxu0 0.0
  %261 = vmatpush2.msra.mxu0 0.0
  %262 = vmatprep.subr.mxu0 0.0
  %263 = vmatpush2.msra.mxu0 0.0
  %264 = vmatprep.subr.mxu0 0.0
  %265 = vmatpush2.msra.mxu0 0.0
  %266 = vmatprep.subr.mxu0 0.0
  %267 = vmatpush2.msra.mxu0 0.0
  %268 = vmatprep.subr.mxu0 0.0
  %269 = vmatpush2.msra.mxu0 0.0
  %270 = vmatprep.subr.mxu0 0.0
  %271 = vmatpush2.msra.mxu0 0.0
  %272 = vmatprep.subr.mxu0 0.0
  %273 = vmatpush2.msra.mxu0 0.0
  %274 = vmatprep.subr.mxu0 0.0
  %275 = vmatpush2.msra.mxu0 0.0
  %276 = vmatprep.subr.mxu0 0.0
  %277 = vmatpush2.msra.mxu0 0.0
  %278 = vmatprep.subr.mxu0 0.0
  %279 = vmatpush2.msra.mxu0 0.0
  %280 = vmatprep.mubr.f32.mxu0 0.0
  %281 = vmatmul.mubr.f32.gmra.mxu0 %v214
  %v282 = vpop.f32.mrf.mxu0
  %v283 = vadd.f32 %v210, %v282
  %v284 = vpop.f32.mrf.mxu0
  %285 = vdwg.mxu0
  %vm286 = vcmask 15360
  %287 = vst.msk [vmem:[%s7] sm:$0xff] %vm286, %v283
  // Predicated region
  $region30: #{tpu_custom_call.1} parent=0 // pred_check
    _
  $region31: #{tpu_custom_call.1} parent=0 // pred_check_branch
    %289 = sbr.rel (0) target = $region33
  $region32: #{tpu_custom_call.1} parent=0 // pred_region
    _
  $region33: #{tpu_custom_call.1} parent=0 // pred_fallthru
    _
  // Predicated region
  $region34: #{tpu_custom_call.1} parent=0 // pred_check
    _
  $region35: #{tpu_custom_call.1} parent=0 // pred_check_branch
    %291 = sbr.rel (0) target = $region37
  $region36: #{tpu_custom_call.1} parent=0 // pred_region
    _
  $region37: #{tpu_custom_call.1} parent=0 // pred_fallthru
    _

</llo_original>
